<compile_context>
chip_gen: v7x
topology: tpu7x:2x2x1
jax: 0.10.0
libtpu: 0.0.40
codegen_flags: <defaults>
</compile_context>

<pallas_src>
import math
from functools import partial

import jax
import jax.numpy as jnp
from jax.experimental import pallas as pl
from jax.experimental.pallas import tpu as pltpu


def _edge_kernel(w_ref, x_ref, halo_ref, out_ref):
    # w_ref:    (9,)       f32 SMEM  -- flattened 3x3 filter fx (row-major)
    # x_ref:    (TH, W)    f32 VMEM  -- this tile's rows (full image width)
    # halo_ref: (1, 2, W)  f32 VMEM  -- [row above tile, row below tile]
    #                                   (zero rows at the image border)
    # out_ref:  (TH, W)    f32 VMEM  -- Ix^2 + Iy^2 for this tile
    TH, W = out_ref.shape

    x = x_ref[...]                       # single aligned tile load
    halo = halo_ref[0]                   # (2, W)
    top = halo[0:1, :]                   # row above the tile
    bot = halo[1:2, :]                   # row below the tile

    # Read the 9 weights from SMEM once (not once per multiply).
    w = [w_ref[k] for k in range(9)]

    def shift_cols(a):
        # Left/right neighbours with the zero-padding border baked in via a
        # zero column -> no lane masks / iota needed, works for any W.
        z = jnp.zeros((a.shape[0], 1), jnp.float32)
        left = jnp.concatenate([z, a[:, : W - 1]], axis=1)    # a[., j-1]
        right = jnp.concatenate([a[:, 1:], z], axis=1)        # a[., j+1]
        return left, a, right

    cols = shift_cols(x)        # column shifts hoisted: 2 full-tile shifts
    top_cols = shift_cols(top)  # (1, W) -- tiny
    bot_cols = shift_cols(bot)  # (1, W) -- tiny

    # torch conv2d is cross-correlation:
    #   Ix[i,j] = sum_{di,dj} fx[di,dj] * x[i+di-1, j+dj-1]
    #   Iy[i,j] = sum_{di,dj} fx[dj,di] * x[i+di-1, j+dj-1]
    # Start from the centre tap (same weight for Ix and Iy).
    p = w[4] * x
    ix = p
    iy = p
    for di in range(3):
        for dj in range(3):
            if di == 1 and dj == 1:
                continue
            c = cols[dj]
            if di == 0:      # row i-1: halo row on top, drop the tile's last row
                win = jnp.concatenate([top_cols[dj], c[: TH - 1, :]], axis=0)
            elif di == 2:    # row i+1: drop the tile's first row, halo row at bottom
                win = jnp.concatenate([c[1:, :], bot_cols[dj]], axis=0)
            else:            # di == 1: the tile itself
                win = c
            if di == dj:     # diagonal taps share the weight -> one multiply
                p = w[di * 3 + dj] * win
                ix = ix + p
                iy = iy + p
            else:
                ix = ix + w[di * 3 + dj] * win
                iy = iy + w[dj * 3 + di] * win

    out_ref[...] = ix * ix + iy * iy


def _vmem_capacity_bytes():
    try:
        return int(pltpu.get_tpu_info().vmem_capacity_bytes)
    except Exception:
        return 64 * 1024 * 1024          # assume the smallest (v7x per-TC VMEM)


def _pick_tile_rows(H, W, requested=None):
    """Return (tile_rows, padded_H)."""
    if requested is not None and requested % 8 == 0 and H % requested == 0:
        return requested, H
    vmem = _vmem_capacity_bytes()
    # ~16 f32 rows of width W live per tile row (double-buffered in/out blocks
    # + in-kernel temporaries); keep well inside the available VMEM.
    budget = (40 << 20) if vmem >= (100 << 20) else (20 << 20)
    per_row = 16 * W * 4
    cap = max(8, min(512, (budget // per_row) // 8 * 8))
    # Prefer a multiple-of-8 divisor of H (no row padding needed).
    if H % 8 == 0:
        best = None
        for t in range(8, min(H, cap) + 1, 8):
            if H % t == 0:
                best = t
        if best is not None:
            return best, H
    # Otherwise zero-pad the rows up to a multiple of the tile height; zero
    # rows keep the zero-padding border semantics and are cropped afterwards.
    th = min(cap, ((H + 7) // 8) * 8)
    hp = ((H + th - 1) // th) * th
    return th, hp


@partial(jax.jit, static_argnames=("tile_rows",))
def warp_edge_filter(x, fx, tile_rows=None):
    """x: (H, W) f32, fx: (3, 3) f32  ->  (H, W) f32  (Ix^2 + Iy^2)."""
    H, W = x.shape
    x = x.astype(jnp.float32)
    fx = fx.astype(jnp.float32)

    TH, Hp = _pick_tile_rows(H, W, tile_rows)
    if Hp != H:
        x = jnp.pad(x, ((0, Hp - H), (0, 0)))
    G = Hp // TH

    # Per-tile row halos: halos[t, 0] = row above tile t, halos[t, 1] = row
    # below it (zero rows at the image border) -- only ~2/TH of the image in
    # extra HBM traffic, instead of padding/copying the whole image.
    zero_row = jnp.zeros((1, W), jnp.float32)
    if G > 1:
        top = jnp.concatenate([zero_row, x[TH - 1:Hp - 1:TH, :]], axis=0)   # (G, W)
        bot = jnp.concatenate([x[TH:Hp:TH, :], zero_row], axis=0)           # (G, W)
    else:
        top = zero_row
        bot = zero_row
    halos = jnp.stack([top, bot], axis=1)                                   # (G, 2, W)

    w_flat = fx.reshape(9)

    # VMEM limit from the actual block footprint (+ headroom for in-kernel
    # temporaries), clamped to the physical capacity.
    vmem_limit = int(min(_vmem_capacity_bytes(), 16 * TH * W * 4 + (8 << 20)))

    out = pl.pallas_call(
        _edge_kernel,
        out_shape=jax.ShapeDtypeStruct((Hp, W), jnp.float32),
        grid=(G,),
        in_specs=[
            pl.BlockSpec(memory_space=pltpu.MemorySpace.SMEM),   # f32[9] filter
            pl.BlockSpec((TH, W), lambda i: (i, 0)),             # row tile
            pl.BlockSpec((1, 2, W), lambda i: (i, 0, 0)),        # its 2 halo rows
        ],
        out_specs=pl.BlockSpec((TH, W), lambda i: (i, 0)),
        compiler_params=pltpu.CompilerParams(
            dimension_semantics=("parallel",),   # megacore sharding where available
            vmem_limit_bytes=vmem_limit,
        ),
    )(w_flat, x, halos)

    return out[:H] if Hp != H else out


def init_fx(key):
    # kaiming_uniform_(a=sqrt(3)) on a (1,1,3,3) weight:
    # fan_in = 9, gain = sqrt(2/(1+a^2)) = sqrt(1/2), bound = gain*sqrt(3/fan_in) = sqrt(1/6)
    bound = math.sqrt(1.0 / 6.0)
    return jax.random.uniform(key, (3, 3), jnp.float32, minval=-bound, maxval=bound)


# TODO(synk): EvalEdgeFilter's custom autograd backward (training path) is not
# implemented; this covers the forward pass only.

if __name__ == "__main__":
    key = jax.random.PRNGKey(0)
    kx, kw = jax.random.split(key)
    H, W = 16, 16
    x = jax.random.normal(kx, (H, W), dtype=jnp.float32)
    fx = init_fx(kw)

    # plain-JAX reference of the same semantics
    xp = jnp.pad(x, ((1, 1), (1, 1)))
    ix_ref = jnp.zeros((H, W), jnp.float32)
    iy_ref = jnp.zeros((H, W), jnp.float32)
    for di in range(3):
        for dj in range(3):
            win = xp[di:di + H, dj:dj + W]
            ix_ref = ix_ref + fx[di, dj] * win
            iy_ref = iy_ref + fx[dj, di] * win
    ref = ix_ref * ix_ref + iy_ref * iy_ref

    # tile_rows=8 -> 2-tile grid, exercising the row-halo path at this size.
    out = warp_edge_filter(x, fx, tile_rows=8)
    out = jax.block_until_ready(out)
    assert out.shape == (H, W) and out.dtype == jnp.float32
    assert jnp.allclose(out, ref, atol=1e-5, rtol=1e-5)

    # default (auto) tiling -> single-tile path with zero halos.
    out2 = jax.block_until_ready(warp_edge_filter(x, fx))
    assert jnp.allclose(out2, ref, atol=1e-5, rtol=1e-5)

    print("KERNEL_OK")
</pallas_src>

<mosaic_0001>
module attributes {stable_mosaic.version = 11 : i64} {
  func.func @_edge_kernel(%arg0: i32, %arg1: memref<9xf32, #tpu.memory_space<smem>>, %arg2: memref<8x16xf32, #tpu.memory_space<vmem>>, %arg3: memref<1x2x16xf32, #tpu.memory_space<vmem>>, %arg4: memref<8x16xf32, #tpu.memory_space<vmem>>) attributes {dimension_semantics = [#tpu.dimension_semantics<parallel>], iteration_bounds = array<i64: 2>, scalar_prefetch = 0 : i64, scratch_operands = 0 : i64, tpu.core_type = #tpu.core_type<tc>, window_params = [{transform_indices = @transform_0, window_bounds = array<i64: 9>}, {transform_indices = @transform_1, window_bounds = array<i64: 8, 16>}, {transform_indices = @transform_2, window_bounds = array<i64: 1, 2, 16>}, {transform_indices = @transform_3, window_bounds = array<i64: 8, 16>}]} {
    %c0 = arith.constant 0 : index
    %c0_0 = arith.constant 0 : index
    %0 = vector.load %arg2[%c0, %c0_0] : memref<8x16xf32, #tpu.memory_space<vmem>>, vector<8x16xf32>
    %c0_1 = arith.constant 0 : index
    %c0_2 = arith.constant 0 : index
    %c0_3 = arith.constant 0 : index
    %1 = vector.load %arg3[%c0_1, %c0_2, %c0_3] : memref<1x2x16xf32, #tpu.memory_space<vmem>>, vector<1x2x16xf32>
    %2 = vector.shape_cast %1 : vector<1x2x16xf32> to vector<2x16xf32>
    %3 = vector.extract_strided_slice %2 {offsets = [0, 0], sizes = [1, 16], strides = [1, 1]} : vector<2x16xf32> to vector<1x16xf32>
    %4 = vector.extract_strided_slice %2 {offsets = [1, 0], sizes = [1, 16], strides = [1, 1]} : vector<2x16xf32> to vector<1x16xf32>
    %c0_4 = arith.constant 0 : index
    %5 = memref.load %arg1[%c0_4] : memref<9xf32, #tpu.memory_space<smem>>
    %c1 = arith.constant 1 : index
    %6 = memref.load %arg1[%c1] : memref<9xf32, #tpu.memory_space<smem>>
    %c2 = arith.constant 2 : index
    %7 = memref.load %arg1[%c2] : memref<9xf32, #tpu.memory_space<smem>>
    %c3 = arith.constant 3 : index
    %8 = memref.load %arg1[%c3] : memref<9xf32, #tpu.memory_space<smem>>
    %c4 = arith.constant 4 : index
    %9 = memref.load %arg1[%c4] : memref<9xf32, #tpu.memory_space<smem>>
    %c5 = arith.constant 5 : index
    %10 = memref.load %arg1[%c5] : memref<9xf32, #tpu.memory_space<smem>>
    %c6 = arith.constant 6 : index
    %11 = memref.load %arg1[%c6] : memref<9xf32, #tpu.memory_space<smem>>
    %c7 = arith.constant 7 : index
    %12 = memref.load %arg1[%c7] : memref<9xf32, #tpu.memory_space<smem>>
    %c8 = arith.constant 8 : index
    %13 = memref.load %arg1[%c8] : memref<9xf32, #tpu.memory_space<smem>>
    %cst = arith.constant 0.000000e+00 : f32
    %14 = vector.broadcast %cst : f32 to vector<8x1xf32>
    %15 = vector.extract_strided_slice %0 {offsets = [0, 0], sizes = [8, 15], strides = [1, 1]} : vector<8x16xf32> to vector<8x15xf32>
    %16 = tpu.concatenate %14, %15 in 1 : vector<8x1xf32>, vector<8x15xf32> -> vector<8x16xf32>
    %17 = vector.extract_strided_slice %0 {offsets = [0, 1], sizes = [8, 15], strides = [1, 1]} : vector<8x16xf32> to vector<8x15xf32>
    %18 = tpu.concatenate %17, %14 in 1 : vector<8x15xf32>, vector<8x1xf32> -> vector<8x16xf32>
    %cst_5 = arith.constant 0.000000e+00 : f32
    %19 = vector.broadcast %cst_5 : f32 to vector<1x1xf32>
    %20 = vector.extract_strided_slice %3 {offsets = [0, 0], sizes = [1, 15], strides = [1, 1]} : vector<1x16xf32> to vector<1x15xf32>
    %21 = tpu.concatenate %19, %20 in 1 : vector<1x1xf32>, vector<1x15xf32> -> vector<1x16xf32>
    %22 = vector.extract_strided_slice %3 {offsets = [0, 1], sizes = [1, 15], strides = [1, 1]} : vector<1x16xf32> to vector<1x15xf32>
    %23 = tpu.concatenate %22, %19 in 1 : vector<1x15xf32>, vector<1x1xf32> -> vector<1x16xf32>
    %cst_6 = arith.constant 0.000000e+00 : f32
    %24 = vector.broadcast %cst_6 : f32 to vector<1x1xf32>
    %25 = vector.extract_strided_slice %4 {offsets = [0, 0], sizes = [1, 15], strides = [1, 1]} : vector<1x16xf32> to vector<1x15xf32>
    %26 = tpu.concatenate %24, %25 in 1 : vector<1x1xf32>, vector<1x15xf32> -> vector<1x16xf32>
    %27 = vector.extract_strided_slice %4 {offsets = [0, 1], sizes = [1, 15], strides = [1, 1]} : vector<1x16xf32> to vector<1x15xf32>
    %28 = tpu.concatenate %27, %24 in 1 : vector<1x15xf32>, vector<1x1xf32> -> vector<1x16xf32>
    %29 = vector.broadcast %9 : f32 to vector<8x16xf32>
    %30 = arith.mulf %29, %0 : vector<8x16xf32>
    %31 = vector.extract_strided_slice %16 {offsets = [0, 0], sizes = [7, 16], strides = [1, 1]} : vector<8x16xf32> to vector<7x16xf32>
    %32 = tpu.concatenate %21, %31 in 0 : vector<1x16xf32>, vector<7x16xf32> -> vector<8x16xf32>
    %33 = vector.broadcast %5 : f32 to vector<8x16xf32>
    %34 = arith.mulf %33, %32 : vector<8x16xf32>
    %35 = arith.addf %30, %34 : vector<8x16xf32>
    %36 = arith.addf %30, %34 : vector<8x16xf32>
    %37 = vector.extract_strided_slice %0 {offsets = [0, 0], sizes = [7, 16], strides = [1, 1]} : vector<8x16xf32> to vector<7x16xf32>
    %38 = tpu.concatenate %3, %37 in 0 : vector<1x16xf32>, vector<7x16xf32> -> vector<8x16xf32>
    %39 = vector.broadcast %6 : f32 to vector<8x16xf32>
    %40 = arith.mulf %39, %38 : vector<8x16xf32>
    %41 = arith.addf %35, %40 : vector<8x16xf32>
    %42 = vector.broadcast %8 : f32 to vector<8x16xf32>
    %43 = arith.mulf %42, %38 : vector<8x16xf32>
    %44 = arith.addf %36, %43 : vector<8x16xf32>
    %45 = vector.extract_strided_slice %18 {offsets = [0, 0], sizes = [7, 16], strides = [1, 1]} : vector<8x16xf32> to vector<7x16xf32>
    %46 = tpu.concatenate %23, %45 in 0 : vector<1x16xf32>, vector<7x16xf32> -> vector<8x16xf32>
    %47 = vector.broadcast %7 : f32 to vector<8x16xf32>
    %48 = arith.mulf %47, %46 : vector<8x16xf32>
    %49 = arith.addf %41, %48 : vector<8x16xf32>
    %50 = vector.broadcast %11 : f32 to vector<8x16xf32>
    %51 = arith.mulf %50, %46 : vector<8x16xf32>
    %52 = arith.addf %44, %51 : vector<8x16xf32>
    %53 = vector.broadcast %8 : f32 to vector<8x16xf32>
    %54 = arith.mulf %53, %16 : vector<8x16xf32>
    %55 = arith.addf %49, %54 : vector<8x16xf32>
    %56 = vector.broadcast %6 : f32 to vector<8x16xf32>
    %57 = arith.mulf %56, %16 : vector<8x16xf32>
    %58 = arith.addf %52, %57 : vector<8x16xf32>
    %59 = vector.broadcast %10 : f32 to vector<8x16xf32>
    %60 = arith.mulf %59, %18 : vector<8x16xf32>
    %61 = arith.addf %55, %60 : vector<8x16xf32>
    %62 = vector.broadcast %12 : f32 to vector<8x16xf32>
    %63 = arith.mulf %62, %18 : vector<8x16xf32>
    %64 = arith.addf %58, %63 : vector<8x16xf32>
    %65 = vector.extract_strided_slice %16 {offsets = [1, 0], sizes = [7, 16], strides = [1, 1]} : vector<8x16xf32> to vector<7x16xf32>
    %66 = tpu.concatenate %65, %26 in 0 : vector<7x16xf32>, vector<1x16xf32> -> vector<8x16xf32>
    %67 = vector.broadcast %11 : f32 to vector<8x16xf32>
    %68 = arith.mulf %67, %66 : vector<8x16xf32>
    %69 = arith.addf %61, %68 : vector<8x16xf32>
    %70 = vector.broadcast %7 : f32 to vector<8x16xf32>
    %71 = arith.mulf %70, %66 : vector<8x16xf32>
    %72 = arith.addf %64, %71 : vector<8x16xf32>
    %73 = vector.extract_strided_slice %0 {offsets = [1, 0], sizes = [7, 16], strides = [1, 1]} : vector<8x16xf32> to vector<7x16xf32>
    %74 = tpu.concatenate %73, %4 in 0 : vector<7x16xf32>, vector<1x16xf32> -> vector<8x16xf32>
    %75 = vector.broadcast %12 : f32 to vector<8x16xf32>
    %76 = arith.mulf %75, %74 : vector<8x16xf32>
    %77 = arith.addf %69, %76 : vector<8x16xf32>
    %78 = vector.broadcast %10 : f32 to vector<8x16xf32>
    %79 = arith.mulf %78, %74 : vector<8x16xf32>
    %80 = arith.addf %72, %79 : vector<8x16xf32>
    %81 = vector.extract_strided_slice %18 {offsets = [1, 0], sizes = [7, 16], strides = [1, 1]} : vector<8x16xf32> to vector<7x16xf32>
    %82 = tpu.concatenate %81, %28 in 0 : vector<7x16xf32>, vector<1x16xf32> -> vector<8x16xf32>
    %83 = vector.broadcast %13 : f32 to vector<8x16xf32>
    %84 = arith.mulf %83, %82 : vector<8x16xf32>
    %85 = arith.addf %77, %84 : vector<8x16xf32>
    %86 = arith.addf %80, %84 : vector<8x16xf32>
    %87 = arith.mulf %85, %85 : vector<8x16xf32>
    %88 = arith.mulf %86, %86 : vector<8x16xf32>
    %89 = arith.addf %87, %88 : vector<8x16xf32>
    %c0_7 = arith.constant 0 : index
    %c0_8 = arith.constant 0 : index
    %90 = vector.load %arg4[%c0_7, %c0_8] : memref<8x16xf32, #tpu.memory_space<vmem>>, vector<8x16xf32>
    tpu.vector_store %arg4[%c0_7, %c0_8], %89 {strides = array<i32>} : memref<8x16xf32, #tpu.memory_space<vmem>>, vector<8x16xf32>,
    return
  }
  func.func @transform_0(%arg0: i32) -> i32 {
    %c0_i32 = arith.constant 0 : i32
    %c0_i32_0 = arith.constant 0 : i32
    return %c0_i32 : i32
  }
  func.func @transform_1(%arg0: i32) -> (i32, i32) {
    %c0_i32 = arith.constant 0 : i32
    %c0_i32_0 = arith.constant 0 : i32
    return %arg0, %c0_i32 : i32, i32
  }
  func.func @transform_2(%arg0: i32) -> (i32, i32, i32) {
    %c0_i32 = arith.constant 0 : i32
    %c0_i32_0 = arith.constant 0 : i32
    %c0_i32_1 = arith.constant 0 : i32
    return %arg0, %c0_i32, %c0_i32_0 : i32, i32, i32
  }
  func.func @transform_3(%arg0: i32) -> (i32, i32) {
    %c0_i32 = arith.constant 0 : i32
    %c0_i32_0 = arith.constant 0 : i32
    return %arg0, %c0_i32 : i32, i32
  }
}

</mosaic_0001>

<llo_original>
// kernel: warp_edge_filter.1
$region0: #{warp_edge_filter.1}
  #allocation0 [shape = 'u32[]', space=smem, size = 0x4, offset = 0x4, fixed_abs, tag = 'smem constant byte address 0x4 - core index']
  #allocation1 [shape = 'u32[144,128]{1,0:T(1,128)}', space=vmem, size = 0x12000, scoped, tag = 'internal scratch']
  %s0 = inlined_call_operand.vmem [shape: f32[9], index: 0, kind: input, shape index: {}]
  %s1 = inlined_call_operand.vmem [shape: f32[16,16], index: 1, kind: input, shape index: {}]
  %s2 = inlined_call_operand.vmem [shape: f32[2,2,16], index: 2, kind: input, shape index: {}]
  %s3 = inlined_call_operand.hbm [shape: f32[16,16], index: 3, kind: output, shape index: {}]
  %s4 = sld [smem:[#allocation0]]
  $region49: #{warp_edge_filter.1} parent=0
    _
  %s6 = ssub.s32 1, %s4
  %s7 = scalar_select 0, %s6, %s4
  $region1: #{warp_edge_filter.1} parent=0
    #allocation2 [shape = 'u8[512]{0}', space=smem, size = 0x200, scoped, tag = 'input window, operand 0, single buffered']
    #allocation3 [shape = 's32[2]{0}', space=sflag, size = 0x8, scoped, tag = 'scoped memory for warp_edge_filter.1']
    #allocation4 [shape = 's32[2]{0}', space=sflag, size = 0x8, scoped, tag = 'scoped memory for warp_edge_filter.1']
    #allocation5 [shape = 'u8[8192]{0}', space=vmem, size = 0x2000, scoped, tag = 'output window, operand 0']
    %8 = vsyncpa [#allocation4], 0
    %9 = vsyncpa [#allocation3], 0
    %s10 = scalar_lea.sflag [#allocation3], 1
    %11 = vsyncpa %s10, 0
    loop: start=0, step=1, limit=4
    $region2: #{warp_edge_filter.1} parent=1 // loop_pre_header
      _
    $region3: #{warp_edge_filter.1} parent=1 // loop_header
      %s13 = sphi 0, %s17
      %p14 = scmp.ge.s32.totalorder %s13, 4
      %s21 = sphi 0, %s21
      %s23 = sphi 0, %s21
      %s24 = sphi 0, %s23
      %s38 = sphi 0, %s24
      %s44 = sphi 0, %s46
      %s47 = sphi 0, %s44
      %s48 = sphi 0, %s47
      %s64 = sphi 0, %s48
      %s70 = sphi 0, %s72
      %s73 = sphi 0, %s70
      %s74 = sphi 0, %s73
      %s90 = sphi 0, %s74
      %s96 = sphi 0, %s98
      %s99 = sphi 0, %s96
      %s100 = sphi 0, %s99
      %s116 = sphi 0, %s100
    $region4: #{warp_edge_filter.1} parent=1 // loop_header_branch
      %16 = sbr.rel (%p14) target = $region8
    $region5: #{warp_edge_filter.1} parent=1 // loop_body
      %s18 = ssub.s32 %s13, 1
      %s19 = ssub.s32 %s13, 2
      %s20 = sadd.s32 %s13, 1
      %s22 = sadd.s32 %s21, 1
      %p25 = scmp.eq.s32.totalorder %s13, 1
      %p26 = scmp.ne.s32.totalorder %s21, %s23
      %p27 = scmp.eq.s32.totalorder %s13, 0
      %p28 = por %p26, %p27
      %p29 = scmp.ne.s32.totalorder %s21, %s23
      %p30 = scmp.eq.s32.totalorder %s18, 1
      %p31 = por %p29, %p30
      %p32 = scmp.ne.s32.totalorder %s23, %s24
      %p33 = scmp.eq.s32.totalorder %s18, 0
      %p34 = por %p32, %p33
      %p35 = scmp.ne.s32.totalorder %s23, %s24
      %p36 = scmp.eq.s32.totalorder %s19, 1
      %p37 = por %p35, %p36
      %p39 = scmp.ne.s32.totalorder %s24, %s38
      %p40 = scmp.eq.s32.totalorder %s19, 0
      %p41 = por %p39, %p40
      %s42 = ssub.s32 %s13, %s20
      %p43 = scmp.eq.s32.totalorder %s42, 0
      %s45 = sadd.s32 %s44, 1
      %s46 = scalar_select %p43, %s44, %s45
      %p49 = pneg %p43
      %p50 = scmp.eq.s32.totalorder %s13, 1
      %p51 = por %p49, %p50
      %p52 = scmp.ne.s32.totalorder %s44, %s47
      %p53 = scmp.eq.s32.totalorder %s13, 0
      %p54 = por %p52, %p53
      %p55 = scmp.ne.s32.totalorder %s44, %s47
      %p56 = scmp.eq.s32.totalorder %s18, 1
      %p57 = por %p55, %p56
      %p58 = scmp.ne.s32.totalorder %s47, %s48
      %p59 = scmp.eq.s32.totalorder %s18, 0
      %p60 = por %p58, %p59
      %p61 = scmp.ne.s32.totalorder %s47, %s48
      %p62 = scmp.eq.s32.totalorder %s19, 1
      %p63 = por %p61, %p62
      %p65 = scmp.ne.s32.totalorder %s48, %s64
      %p66 = scmp.eq.s32.totalorder %s19, 0
      %p67 = por %p65, %p66
      %s68 = ssub.s32 %s13, %s20
      %p69 = scmp.eq.s32.totalorder %s68, 0
      %s71 = sadd.s32 %s70, 1
      %s72 = scalar_select %p69, %s70, %s71
      %p75 = pneg %p69
      %p76 = scmp.eq.s32.totalorder %s13, 1
      %p77 = por %p75, %p76
      %p78 = scmp.ne.s32.totalorder %s70, %s73
      %p79 = scmp.eq.s32.totalorder %s13, 0
      %p80 = por %p78, %p79
      %p81 = scmp.ne.s32.totalorder %s70, %s73
      %p82 = scmp.eq.s32.totalorder %s18, 1
      %p83 = por %p81, %p82
      %p84 = scmp.ne.s32.totalorder %s73, %s74
      %p85 = scmp.eq.s32.totalorder %s18, 0
      %p86 = por %p84, %p85
      %p87 = scmp.ne.s32.totalorder %s73, %s74
      %p88 = scmp.eq.s32.totalorder %s19, 1
      %p89 = por %p87, %p88
      %p91 = scmp.ne.s32.totalorder %s74, %s90
      %p92 = scmp.eq.s32.totalorder %s19, 0
      %p93 = por %p91, %p92
      %s94 = ssub.s32 %s13, %s20
      %p95 = scmp.eq.s32.totalorder %s94, 0
      %s97 = sadd.s32 %s96, 1
      %s98 = scalar_select %p95, %s96, %s97
      %p101 = pneg %p95
      %p102 = scmp.eq.s32.totalorder %s13, 1
      %p103 = por %p101, %p102
      %p104 = scmp.ne.s32.totalorder %s96, %s99
      %p105 = scmp.eq.s32.totalorder %s13, 0
      %p106 = por %p104, %p105
      %p107 = scmp.ne.s32.totalorder %s96, %s99
      %p108 = scmp.eq.s32.totalorder %s18, 1
      %p109 = por %p107, %p108
      %p110 = scmp.ne.s32.totalorder %s99, %s100
      %p111 = scmp.eq.s32.totalorder %s18, 0
      %p112 = por %p110, %p111
      %p113 = scmp.ne.s32.totalorder %s99, %s100
      %p114 = scmp.eq.s32.totalorder %s19, 1
      %p115 = por %p113, %p114
      %p117 = scmp.ne.s32.totalorder %s100, %s116
      %p118 = scmp.eq.s32.totalorder %s19, 0
      %p119 = por %p117, %p118
      %p120 = scmp.le.s32.totalorder 1, %s13
      %p121 = scmp.lt.s32.totalorder %s13, 3
      %p122 = pnand %p120, %p121
      %p123 = pneg %p122
      // Predicated region
      $region9: #{warp_edge_filter.1} parent=5 // pred_check
        _
      $region10: #{warp_edge_filter.1} parent=5 // pred_check_branch
        %125 = sbr.rel (%p122) target = $region12
      $region11: #{warp_edge_filter.1} parent=5 // pred_region
        %s126 = ssub.s32 %s13, 1
        // Predicated region
        $region13: #{warp_edge_filter.1} parent=11 // pred_check
          %p127 = pneg %p34
        $region14: #{warp_edge_filter.1} parent=11 // pred_check_branch
          %129 = sbr.rel (%p127) target = $region16
        $region15: #{warp_edge_filter.1} parent=11 // pred_region
          %s131 = ssub.s32 16, 16
          %132 = vsyncadd [#allocation4], %s131
          %s134 = sshll.u32 %s0, 4
          %s135 = int_to_ptr.vmem [resolvable:$true] %s134
          %137 = dma.vmem_to_smem %s135, 16, [#allocation2], [#allocation4]
        $region16: #{warp_edge_filter.1} parent=11 // pred_fallthru
          _
      $region12: #{warp_edge_filter.1} parent=5 // pred_fallthru
        _
      %p138 = scmp.lt.s32.totalorder %s13, 2
      // Predicated region
      $region17: #{warp_edge_filter.1} parent=5 // pred_check
        %p139 = pneg %p138
      $region18: #{warp_edge_filter.1} parent=5 // pred_check_branch
        %141 = sbr.rel (%p139) target = $region20
      $region19: #{warp_edge_filter.1} parent=5 // pred_region
        // Predicated region
        $region21: #{warp_edge_filter.1} parent=19 // pred_check
          %p142 = pneg %p54
        $region22: #{warp_edge_filter.1} parent=19 // pred_check_branch
          %144 = sbr.rel (%p142) target = $region24
        $region23: #{warp_edge_filter.1} parent=19 // pred_region
          %p145 = scmp.lt.s32.totalorder %s13, 1
          %s146 = scalar_select %p145, %s13, 1
          %s147 = smul.addr %s146, 8
          %s148 = scalar_lea.vmem %s1, %s147
        $region24: #{warp_edge_filter.1} parent=19 // pred_fallthru
          _
        // Predicated region
        $region25: #{warp_edge_filter.1} parent=19 // pred_check
          %p149 = pneg %p80
        $region26: #{warp_edge_filter.1} parent=19 // pred_check_branch
          %151 = sbr.rel (%p149) target = $region28
        $region27: #{warp_edge_filter.1} parent=19 // pred_region
          %p152 = scmp.lt.s32.totalorder %s13, 1
          %s153 = scalar_select %p152, %s13, 1
          %s154 = smul.addr %s153, 2
          %s155 = scalar_lea.vmem %s2, %s154
        $region28: #{warp_edge_filter.1} parent=19 // pred_fallthru
          _
      $region20: #{warp_edge_filter.1} parent=5 // pred_fallthru
        _
      %p156 = scmp.le.s32.totalorder 1, %s13
      %p157 = scmp.lt.s32.totalorder %s13, 3
      %p158 = pnand %p156, %p157
      %p159 = pneg %p158
      // Predicated region
      $region29: #{warp_edge_filter.1} parent=5 // pred_check
        _
      $region30: #{warp_edge_filter.1} parent=5 // pred_check_branch
        %161 = sbr.rel (%p158) target = $region32
      $region31: #{warp_edge_filter.1} parent=5 // pred_region
        %s162 = ssub.s32 %s13, 1
        // Predicated region
        $region33: #{warp_edge_filter.1} parent=31 // pred_check
          %p163 = pneg %p34
        $region34: #{warp_edge_filter.1} parent=31 // pred_check_branch
          %165 = sbr.rel (%p163) target = $region36
        $region35: #{warp_edge_filter.1} parent=31 // pred_region
          %166 = dma.done [#allocation4], 16
        $region36: #{warp_edge_filter.1} parent=31 // pred_fallthru
          _
        %167 = sfence
        %p168 = pneg %p34
        %p169 = pneg %p31
        %p170 = scmp.lt.s32.totalorder %s18, 1
        %s171 = scalar_select %p170, %s18, 1
        %s172 = smul.addr %s171, 8
        %s173 = scalar_lea.vmem %s1, %s172
        %p174 = pneg %p60
        %p175 = pneg %p57
        %p176 = scmp.lt.s32.totalorder %s18, 1
        %s177 = scalar_select %p176, %s18, 1
        %s178 = smul.addr %s177, 2
        %s179 = scalar_lea.vmem %s2, %s178
        %p180 = pneg %p86
        %p181 = pneg %p83
        %p182 = pneg %p112
        %p183 = pneg %p109
        %s184 = sand.u32 %s99, 1
        %s185 = scalar_lea.sflag [#allocation3], %s184
        %s186 = sand.u32 %s99, 1
        %s187 = smul.addr %s186, 8
        %s188 = scalar_lea.vmem [#allocation5], %s187
        %p189 = scmp.lt.s32.totalorder %s18, 1
        %s190 = scalar_select %p189, %s18, 1
        %s191 = smul.addr %s190, 8
        %s192 = scalar_lea.vmem %s1, %s191
        %p193 = scmp.lt.s32.totalorder %s18, 1
        %s194 = scalar_select %p193, %s18, 1
        %s195 = smul.addr %s194, 2
        %s196 = scalar_lea.vmem %s2, %s195
        %v197 = vld [vmem:[%s192] sm:$0xff]
        %v198 = vld [vmem:[%s196] sm:$0x3]
        %s199 = sld [smem:[#allocation2]]
        %s200 = sld [smem:[#allocation2 + $0x1]]
        %s201 = sld [smem:[#allocation2 + $0x2]]
        %s202 = sld [smem:[#allocation2 + $0x3]]
        %s203 = sld [smem:[#allocation2 + $0x4]]
        %s204 = sld [smem:[#allocation2 + $0x5]]
        %s205 = sld [smem:[#allocation2 + $0x6]]
        %s206 = sld [smem:[#allocation2 + $0x7]]
        %s207 = sld [smem:[#allocation2 + $0x8]]
        %209 = vrot.lane.b32.xlu0 %v197, 1
        %v210 = vpop.permute.xlu0 %209
        %vm212 = vcmask 7168
        %v213 = vsel %vm212, 0.0, %v210
        %214 = vrot.lane.b32.xlu0 %v197, 127
        %v215 = vpop.permute.xlu0 %214
        %vm217 = vcmask 121856
        %v218 = vsel %vm217, %v215, 0.0
        %220 = vrot.lane.b32.xlu0 %v198, 1
        %v221 = vpop.permute.xlu0 %220
        %v223 = vsel %vm212, 0.0, %v221
        %224 = vrot.lane.b32.xlu0 %v198, 127
        %v225 = vpop.permute.xlu0 %224
        %v227 = vsel %vm217, %v225, 0.0
        %v228 = vrot.slane %v198, 1
        %229 = vrot.lane.b32.xlu0 %v228, 1
        %v230 = vpop.permute.xlu0 %229
        %v232 = vsel %vm212, 0.0, %v230
        %v233 = vstv %s203
        %v234 = vmul.f32 %v233, %v197
        %v236 = vrot.slane %v213, 7
        %vm238 = vcmask 1040384
        %v239 = vsel %vm238, %v223, %v236
        %v240 = vstv %s199
        %v241 = vmul.f32 %v240, %v239
        %v242 = vadd.f32 %v234, %v241
        %v243 = vrot.slane %v197, 7
        %v245 = vsel %vm238, %v198, %v243
        %v246 = vstv %s200
        %v247 = vmul.f32 %v246, %v245
        %v248 = vadd.f32 %v242, %v247
        %v249 = vstv %s202
        %v250 = vmul.f32 %v249, %v245
        %v251 = vadd.f32 %v242, %v250
        %v253 = vrot.slane %v218, 7
        %v255 = vsel %vm238, %v227, %v253
        %v256 = vstv %s201
        %v257 = vmul.f32 %v256, %v255
        %v258 = vadd.f32 %v248, %v257
        %v259 = vstv %s205
        %v260 = vmul.f32 %v259, %v255
        %v261 = vadd.f32 %v251, %v260
        %v262 = vmul.f32 %v249, %v213
        %v263 = vadd.f32 %v258, %v262
        %v264 = vmul.f32 %v246, %v213
        %v265 = vadd.f32 %v261, %v264
        %v266 = vstv %s204
        %v267 = vmul.f32 %v266, %v218
        %v268 = vadd.f32 %v263, %v267
        %v269 = vstv %s206
        %v270 = vmul.f32 %v269, %v218
        %v271 = vadd.f32 %v265, %v270
        %v272 = vrot.slane %v213, 1
        %v275 = vrot.slane %v232, 1
        %vm277 = vcmask 1046528
        %v278 = vsel %vm277, %v272, %v275
        %v279 = vmul.f32 %v259, %v278
        %v280 = vadd.f32 %v268, %v279
        %v281 = vmul.f32 %v256, %v278
        %v282 = vadd.f32 %v271, %v281
        %v283 = vrot.slane %v197, 1
        %v285 = vrot.slane %v198, 2
        %v287 = vsel %vm277, %v283, %v285
        %v288 = vmul.f32 %v269, %v287
        %v289 = vadd.f32 %v280, %v288
        %v290 = vmul.f32 %v266, %v287
        %v291 = vadd.f32 %v282, %v290
        %v292 = vrot.slane %v218, 1
        %v295 = vrot.slane %v227, 2
        %v297 = vsel %vm277, %v292, %v295
        %v298 = vstv %s207
        %v299 = vmul.f32 %v298, %v297
        %v300 = vadd.f32 %v289, %v299
        %v301 = vadd.f32 %v291, %v299
        %v302 = vmul.f32 %v300, %v300
        %v303 = vmul.f32 %v301, %v301
        %v304 = vadd.f32 %v302, %v303
        %vm305 = vcmask 130048
        %306 = vst.msk [vmem:[%s188] sm:$0xff] %vm305, %v304
        %s307 = sand.u32 %s99, 1
        %s308 = scalar_lea.sflag [#allocation3], %s307
        %s309 = sand.u32 %s99, 1
        %s310 = smul.addr %s309, 8
        %s311 = scalar_lea.vmem [#allocation5], %s310
        // Predicated region
        $region37: #{warp_edge_filter.1} parent=31 // pred_check
          %p312 = pneg %p109
        $region38: #{warp_edge_filter.1} parent=31 // pred_check_branch
          %314 = sbr.rel (%p312) target = $region40
        $region39: #{warp_edge_filter.1} parent=31 // pred_region
          %s316 = ssub.s32 128, 128
          %317 = vsyncadd %s308, %s316
          %s318 = smul.addr %s18, 128
          %s319 = scalar_lea.hbm %s3, %s318
          %s321 = sshll.u32 %s311, 4
          %s322 = int_to_ptr.vmem [resolvable:$true] %s321
          %324 = dma.vmem_to_hbm [thread:$0]  %s322, 128, %s319, %s308
        $region40: #{warp_edge_filter.1} parent=31 // pred_fallthru
          _
      $region32: #{warp_edge_filter.1} parent=5 // pred_fallthru
        _
      %p325 = scmp.le.s32.totalorder 2, %s13
      // Predicated region
      $region41: #{warp_edge_filter.1} parent=5 // pred_check
        %p326 = pneg %p325
      $region42: #{warp_edge_filter.1} parent=5 // pred_check_branch
        %328 = sbr.rel (%p326) target = $region44
      $region43: #{warp_edge_filter.1} parent=5 // pred_region
        %s329 = ssub.s32 %s13, 2
        // Predicated region
        $region45: #{warp_edge_filter.1} parent=43 // pred_check
          %p330 = pneg %p115
        $region46: #{warp_edge_filter.1} parent=43 // pred_check_branch
          %332 = sbr.rel (%p330) target = $region48
        $region47: #{warp_edge_filter.1} parent=43 // pred_region
          %s333 = sand.u32 %s100, 1
          %s334 = scalar_lea.sflag [#allocation3], %s333
          %s335 = sand.u32 %s100, 1
          %s336 = smul.addr %s335, 8
          %s337 = scalar_lea.vmem [#allocation5], %s336
          %338 = dma.done %s334, 128
        $region48: #{warp_edge_filter.1} parent=43 // pred_fallthru
          _
      $region44: #{warp_edge_filter.1} parent=5 // pred_fallthru
        _
    $region6: #{warp_edge_filter.1} parent=1 // loop_footer
      %s17 = sadd.s32 1, %s13
    $region7: #{warp_edge_filter.1} parent=1 // loop_footer_branch
      %12 = sbr.rel target = $region3
    $region8: #{warp_edge_filter.1} parent=1 // loop_exit
      _
    %339 = vsyncpa [#allocation3], 1
    %s340 = scalar_lea.sflag [#allocation3], 1
    %341 = vsyncpa %s340, 1
    %342 = vsyncpa [#allocation4], 1
    %s343 = scalar_lea.sflag [#allocation4], 1
    %344 = vsyncpa %s343, 1

</llo_original>
